<compile_context>
chip_gen: v5e
topology: v5e:2x2
jax: 0.10.0
libtpu: 0.0.40
codegen_flags: <defaults>
</compile_context>

<pallas_src>
import math
import functools

import jax
import jax.numpy as jnp
from jax.experimental import pallas as pl
from jax.experimental.pallas import tpu as pltpu


# ----------------------------------------------------------------------------
# Kernel
# ----------------------------------------------------------------------------
def _ulinear_kernel(x_ref, w_ref, scale_ref, *rest, has_bias, out_acc):
    """Grid = (Mp/tm, Np/tn, Kp/tk); K is the (arbitrary) reduction axis.

    x_ref:     (tm, tk)   activations
    w_ref:     (tk, tn)   pre-transposed weight tile (K, N layout)
    scale_ref: (1, tn)    mbias + mbias_bias   (f32)
    shift_ref: (1, tn)    bias + bias_bias     (f32, only if has_bias)
    o_ref:     (tm, tn)   output tile (f32 output doubles as accumulator)
    acc_ref:   (tm, tn)   f32 accumulator scratch (only if not out_acc)
    """
    if has_bias:
        shift_ref = rest[0]
        rest = rest[1:]
    else:
        shift_ref = None

    if out_acc:
        (o_ref,) = rest
        acc_ref = o_ref                      # accumulate straight into the f32 output block
    else:
        o_ref, acc_ref = rest

    k = pl.program_id(2)

    @pl.when(k == 0)
    def _():
        acc_ref[...] = jnp.zeros_like(acc_ref)

    # Standard (tm,tk) @ (tk,tn) MXU matmul -- weight already in (K, N) layout,
    # so no on-chip transpose is needed.
    acc_ref[...] += jnp.dot(
        x_ref[...], w_ref[...], preferred_element_type=jnp.float32
    )

    @pl.when(k == pl.num_programs(2) - 1)
    def _():
        y = acc_ref[...] * scale_ref[...]    # (1, tn) broadcasts over rows
        if has_bias:
            y = y + shift_ref[...]
        o_ref[...] = y.astype(o_ref.dtype)


# ----------------------------------------------------------------------------
# Hardware / tiling helpers
# ----------------------------------------------------------------------------
def _round_up(x, m):
    return ((x + m - 1) // m) * m


def _tpu_vmem_and_multicore():
    """Per-TensorCore VMEM capacity (bytes) and whether chip has >1 TC (v7x)."""
    kind = ""
    try:
        kind = jax.devices()[0].device_kind.lower()
    except Exception:
        pass
    multi_tc = ("v7" in kind) or ("7x" in kind)

    cap = None
    try:
        cap = int(pltpu.get_tpu_info().vmem_capacity_bytes)
    except Exception:
        cap = None
    if cap is None or cap <= 0:
        cap = (64 << 20) if multi_tc else (128 << 20)
    if multi_tc:
        # v7x has 64 MiB per TensorCore; clamp even if the query returns the
        # chip-level figure, so vmem_limit_bytes stays <= ~54 MiB.
        cap = min(cap, 64 << 20)
    return cap, multi_tc


def _select_tiles(M, N, K, in_itemsize, out_itemsize, vmem_budget,
                  multi_tc, out_acc, w_buffers):
    """VMEM-budget-gated tile heuristic (generation-aware via the budget)."""
    M_pad = _round_up(M, 8)
    N_pad = _round_up(N, 128)
    K_pad = _round_up(K, 128)

    def fits(tm_, tn_, tk_):
        fp = (2 * tm_ * tk_ * in_itemsize              # x double-buffered
              + w_buffers * tk_ * tn_ * in_itemsize    # W multi-buffered
              + 2 * tm_ * tn_ * out_itemsize           # output double-buffered
              + (0 if out_acc else tm_ * tn_ * 4)      # f32 acc scratch
              + 4 * tn_ * 4)                           # scale / shift tiles
        return fp <= vmem_budget

    # --- tm: keep every row resident for decode-like shapes -----------------
    if M_pad <= 256:
        tm = M_pad
    else:
        tm = min(_round_up(min(M_pad, 1024), 256), M_pad)

    # --- tn: lane-dense, large enough to cross the HBM ridge on v6e/v5e -----
    tn = min(N_pad, 2048)
    # Megacore (v7x): if the i axis collapses to 1 block, split N so both
    # TensorCores get work.
    if multi_tc and M_pad <= tm and N_pad >= 256:
        tn = min(tn, max(128, (N_pad // 2) // 128 * 128))

    # --- tk: 512-2048 sweet spot; collapse K entirely for small-M decode ----
    tk = min(K_pad, 2048)
    if M_pad <= 256 and fits(tm, tn, K_pad):
        tk = K_pad                                     # single K step

    # Shrink in priority order until the pipeline footprint fits the budget.
    while not fits(tm, tn, tk):
        if tk > 512:
            tk = max(512, tk // 2)
        elif tn > 256:
            tn = max(256, (tn // 2 // 128) * 128)
        elif tm > 256:
            tm = max(256, _round_up(tm // 2, 8))
        elif tk > 128:
            tk = max(128, tk // 2)
        elif tn > 128:
            tn = 128
        elif tm > 8:
            tm = max(8, _round_up(tm // 2, 8))
        else:
            break

    return tm, tn, tk


def _pad2d(a, rows, cols):
    pr = rows - a.shape[0]
    pc = cols - a.shape[1]
    if pr == 0 and pc == 0:
        return a
    return jnp.pad(a, ((0, pr), (0, pc)))


# ----------------------------------------------------------------------------
# Forward wrapper
# ----------------------------------------------------------------------------
@functools.partial(jax.jit,
                   static_argnames=("allow_bf16", "tm", "tn", "tk", "w_buffers"))
def ulinear_forward(x, weight, mbias, mbias_bias, bias=None, bias_bias=None,
                    *, allow_bf16=True, tm=None, tn=None, tk=None, w_buffers=2):
    """x: (..., in_features); weight: (out_features, in_features) like PyTorch."""
    out_features, in_features = weight.shape
    orig_shape = x.shape
    out_dtype = x.dtype

    M = 1
    for d in orig_shape[:-1]:
        M *= d
    K = in_features
    N = out_features

    x2d = x.reshape(M, K)

    # bf16 MXU inputs by default (f32 accumulation preserved in-kernel).
    if allow_bf16 and x2d.dtype == jnp.float32:
        compute_dtype = jnp.bfloat16
    else:
        compute_dtype = x2d.dtype
    x2d = x2d.astype(compute_dtype)
    # One-time HBM transpose to (K, N): the kernel then runs a standard
    # (tm,tk)x(tk,tn) matmul with zero on-chip transpose work.
    # TODO(synk): in a real model, store/carry the weight pre-transposed (and
    # pre-padded) across calls so this transpose+pad is not paid per forward.
    wt = weight.astype(compute_dtype).T                # (K, N)

    in_itemsize = jnp.dtype(compute_dtype).itemsize
    out_itemsize = jnp.dtype(out_dtype).itemsize

    scale = (mbias.astype(jnp.float32)
             + mbias_bias.astype(jnp.float32)).reshape(1, N)
    has_bias = bias is not None
    if has_bias:
        bb = jnp.zeros((1,), jnp.float32) if bias_bias is None \
            else bias_bias.astype(jnp.float32)
        shift = (bias.astype(jnp.float32) + bb).reshape(1, N)

    # f32 outputs accumulate directly into the output block (no acc scratch).
    out_acc = (jnp.dtype(out_dtype) == jnp.dtype(jnp.float32))

    # --- generation-aware VMEM budget ---------------------------------------
    vmem_cap, multi_tc = _tpu_vmem_and_multicore()
    vmem_budget = int(vmem_cap * 0.70)        # tiles must fit in this
    vmem_limit = int(vmem_cap * 0.85)         # scoped limit given to Mosaic

    a_tm, a_tn, a_tk = _select_tiles(M, N, K, in_itemsize, out_itemsize,
                                     vmem_budget, multi_tc, out_acc, w_buffers)
    tm = a_tm if tm is None else tm
    tn = a_tn if tn is None else tn
    tk = a_tk if tk is None else tk

    # Pad up to tile multiples (zero pad is exact for the matmul; padded
    # output rows/cols are sliced off below).
    Mp, Np, Kp = _round_up(M, tm), _round_up(N, tn), _round_up(K, tk)
    x2d = _pad2d(x2d, Mp, Kp)
    wt = _pad2d(wt, Kp, Np)
    scale = _pad2d(scale, 1, Np)
    if has_bias:
        shift = _pad2d(shift, 1, Np)

    grid = (Mp // tm, Np // tn, Kp // tk)

    if w_buffers > 2:
        w_spec = pl.BlockSpec((tk, tn), lambda i, j, k: (k, j),
                              pipeline_mode=pl.Buffered(w_buffers))
    else:
        w_spec = pl.BlockSpec((tk, tn), lambda i, j, k: (k, j))

    in_specs = [
        pl.BlockSpec((tm, tk), lambda i, j, k: (i, k)),   # x
        w_spec,                                           # W^T (K, N layout)
        pl.BlockSpec((1, tn), lambda i, j, k: (0, j)),    # scale
    ]
    inputs = [x2d, wt, scale]
    if has_bias:
        in_specs.append(pl.BlockSpec((1, tn), lambda i, j, k: (0, j)))  # shift
        inputs.append(shift)

    # Truthful HBM traffic estimate: x is re-read once per j block, W once per
    # i block, output written once.
    cost = pl.CostEstimate(
        flops=2 * M * N * K,
        transcendentals=0,
        bytes_accessed=(Mp * Kp * in_itemsize * (Np // tn)
                        + Kp * Np * in_itemsize * (Mp // tm)
                        + Mp * Np * out_itemsize),
    )

    scratch_shapes = [] if out_acc else [pltpu.VMEM((tm, tn), jnp.float32)]

    out = pl.pallas_call(
        functools.partial(_ulinear_kernel, has_bias=has_bias, out_acc=out_acc),
        out_shape=jax.ShapeDtypeStruct((Mp, Np), out_dtype),
        grid_spec=pltpu.PrefetchScalarGridSpec(
            num_scalar_prefetch=0,
            grid=grid,
            in_specs=in_specs,
            out_specs=pl.BlockSpec((tm, tn), lambda i, j, k: (i, j)),
            scratch_shapes=scratch_shapes,
        ),
        compiler_params=pltpu.CompilerParams(
            dimension_semantics=("parallel", "parallel", "arbitrary"),
            vmem_limit_bytes=vmem_limit,
        ),
        cost_estimate=cost,
    )(*inputs)

    out = out[:M, :N]
    return out.reshape(*orig_shape[:-1], N)


# ----------------------------------------------------------------------------
# Parameter init mirroring ULinear.reset_parameters()
# ----------------------------------------------------------------------------
def init_ulinear_params(key, in_features, out_features, bias=True,
                        dtype=jnp.float32):
    kw, kb = jax.random.split(key)
    # kaiming_uniform_(a=sqrt(5)) on (out, in) -> bound = 1/sqrt(fan_in)
    bound_w = 1.0 / math.sqrt(in_features)
    weight = jax.random.uniform(
        kw, (out_features, in_features), dtype, -bound_w, bound_w)
    mbias = jnp.ones((out_features,), dtype)
    mbias_bias = jnp.zeros((1,), dtype)
    if bias:
        bound_b = 1.0 / math.sqrt(in_features)
        b = jax.random.uniform(kb, (out_features,), dtype, -bound_b, bound_b)
        bias_bias = jnp.zeros((1,), dtype)
    else:
        b = None
        bias_bias = None
    return weight, mbias, mbias_bias, b, bias_bias


def _ref_forward(x, weight, mbias, mbias_bias, bias, bias_bias):
    y = jnp.dot(x, weight.T) * (mbias + mbias_bias)
    if bias is not None:
        y = y + (bias + bias_bias)
    return y


if __name__ == "__main__":
    key = jax.random.PRNGKey(0)
    k_x, k_p, k_x2, k_p2 = jax.random.split(key, 4)

    # --- main check: small shape, with bias ---------------------------------
    batch, seq, in_features, out_features = 2, 8, 32, 64
    x = jax.random.normal(k_x, (batch, seq, in_features), jnp.float32)
    weight, mbias, mbias_bias, bias, bias_bias = init_ulinear_params(
        k_p, in_features, out_features, bias=True)
    ref = _ref_forward(x, weight, mbias, mbias_bias, bias, bias_bias)

    # default path: bf16 MXU inputs, f32 accumulation
    y = jax.block_until_ready(
        ulinear_forward(x, weight, mbias, mbias_bias, bias, bias_bias))
    assert y.shape == (batch, seq, out_features)
    assert jnp.allclose(y, ref, atol=2e-2, rtol=2e-2)

    # pure f32 path: tight tolerance
    y_f32 = jax.block_until_ready(
        ulinear_forward(x, weight, mbias, mbias_bias, bias, bias_bias,
                        allow_bf16=False))
    assert jnp.allclose(y_f32, ref, atol=1e-4, rtol=1e-4)

    # --- odd (non-aligned) shapes, no bias: exercises padding + has_bias=False
    x2 = jax.random.normal(k_x2, (3, 5, 40), jnp.float32)
    w2, mb2, mbb2, _, _ = init_ulinear_params(k_p2, 40, 72, bias=False)
    y2 = jax.block_until_ready(
        ulinear_forward(x2, w2, mb2, mbb2, allow_bf16=False))
    ref2 = _ref_forward(x2, w2, mb2, mbb2, None, None)
    assert y2.shape == (3, 5, 72)
    assert jnp.allclose(y2, ref2, atol=1e-4, rtol=1e-4)

    print("KERNEL_OK")
</pallas_src>

<mosaic_0001>
module attributes {stable_mosaic.version = 11 : i64} {
  func.func @_ulinear_kernel(%arg0: i32, %arg1: i32, %arg2: i32, %arg3: memref<16x128xbf16, #tpu.memory_space<vmem>>, %arg4: memref<128x128xbf16, #tpu.memory_space<vmem>>, %arg5: memref<1x128xf32, #tpu.memory_space<vmem>>, %arg6: memref<1x128xf32, #tpu.memory_space<vmem>>, %arg7: memref<16x128xf32, #tpu.memory_space<vmem>>) attributes {dimension_semantics = [#tpu.dimension_semantics<parallel>, #tpu.dimension_semantics<parallel>, #tpu.dimension_semantics<arbitrary>], iteration_bounds = array<i64: 1, 1, 1>, scalar_prefetch = 0 : i64, scratch_operands = 0 : i64, tpu.core_type = #tpu.core_type<tc>, window_params = [{transform_indices = @transform_0, window_bounds = array<i64: 16, 128>}, {transform_indices = @transform_1, window_bounds = array<i64: 128, 128>}, {transform_indices = @transform_2, window_bounds = array<i64: 1, 128>}, {transform_indices = @transform_3, window_bounds = array<i64: 1, 128>}, {transform_indices = @transform_4, window_bounds = array<i64: 16, 128>}]} {
    %c0_i32 = arith.constant 0 : i32
    %0 = arith.cmpi eq, %arg2, %c0_i32 : i32
    %1 = arith.extui %0 : i1 to i32
    %c0_i32_0 = arith.constant 0 : i32
    %2 = arith.cmpi ne, %1, %c0_i32_0 : i32
    scf.if %2 {
      %cst_10 = arith.constant 0.000000e+00 : f32
      %12 = vector.broadcast %cst_10 : f32 to vector<16x128xf32>
      %c0_11 = arith.constant 0 : index
      %c0_12 = arith.constant 0 : index
      %13 = vector.load %arg7[%c0_11, %c0_12] : memref<16x128xf32, #tpu.memory_space<vmem>>, vector<16x128xf32>
      tpu.vector_store %arg7[%c0_11, %c0_12], %12 {strides = array<i32>} : memref<16x128xf32, #tpu.memory_space<vmem>>, vector<16x128xf32>,
    } else {
    }
    %c0 = arith.constant 0 : index
    %c0_1 = arith.constant 0 : index
    %3 = vector.load %arg7[%c0, %c0_1] : memref<16x128xf32, #tpu.memory_space<vmem>>, vector<16x128xf32>
    %c0_2 = arith.constant 0 : index
    %c0_3 = arith.constant 0 : index
    %4 = vector.load %arg3[%c0_2, %c0_3] : memref<16x128xbf16, #tpu.memory_space<vmem>>, vector<16x128xbf16>
    %c0_4 = arith.constant 0 : index
    %c0_5 = arith.constant 0 : index
    %5 = vector.load %arg4[%c0_4, %c0_5] : memref<128x128xbf16, #tpu.memory_space<vmem>>, vector<128x128xbf16>
    %cst = arith.constant dense<0.000000e+00> : vector<16x128xf32>
    %6 = tpu.matmul %4, %5, %cst {dimension_numbers = #tpu.dot_dimension_numbers<[1], [0], [0], [1], [0, 0, 1, 1], [], []>} : vector<16x128xbf16>, vector<128x128xbf16>, vector<16x128xf32> -> vector<16x128xf32>
    %7 = arith.addf %3, %6 : vector<16x128xf32>
    %c0_6 = arith.constant 0 : index
    %c0_7 = arith.constant 0 : index
    %8 = vector.load %arg7[%c0_6, %c0_7] : memref<16x128xf32, #tpu.memory_space<vmem>>, vector<16x128xf32>
    tpu.vector_store %arg7[%c0_6, %c0_7], %7 {strides = array<i32>} : memref<16x128xf32, #tpu.memory_space<vmem>>, vector<16x128xf32>,
    %c0_i32_8 = arith.constant 0 : i32
    %9 = arith.cmpi eq, %arg2, %c0_i32_8 : i32
    %10 = arith.extui %9 : i1 to i32
    %c0_i32_9 = arith.constant 0 : i32
    %11 = arith.cmpi ne, %10, %c0_i32_9 : i32
    scf.if %11 {
      %c0_10 = arith.constant 0 : index
      %c0_11 = arith.constant 0 : index
      %12 = vector.load %arg7[%c0_10, %c0_11] : memref<16x128xf32, #tpu.memory_space<vmem>>, vector<16x128xf32>
      %c0_12 = arith.constant 0 : index
      %c0_13 = arith.constant 0 : index
      %13 = vector.load %arg5[%c0_12, %c0_13] : memref<1x128xf32, #tpu.memory_space<vmem>>, vector<1x128xf32>
      %14 = vector.broadcast %13 : vector<1x128xf32> to vector<16x128xf32>
      %15 = arith.mulf %12, %14 : vector<16x128xf32>
      %c0_14 = arith.constant 0 : index
      %c0_15 = arith.constant 0 : index
      %16 = vector.load %arg6[%c0_14, %c0_15] : memref<1x128xf32, #tpu.memory_space<vmem>>, vector<1x128xf32>
      %17 = vector.broadcast %16 : vector<1x128xf32> to vector<16x128xf32>
      %18 = arith.addf %15, %17 : vector<16x128xf32>
      %c0_16 = arith.constant 0 : index
      %c0_17 = arith.constant 0 : index
      %19 = vector.load %arg7[%c0_16, %c0_17] : memref<16x128xf32, #tpu.memory_space<vmem>>, vector<16x128xf32>
      tpu.vector_store %arg7[%c0_16, %c0_17], %18 {strides = array<i32>} : memref<16x128xf32, #tpu.memory_space<vmem>>, vector<16x128xf32>,
    } else {
    }
    return
  }
  func.func @transform_0(%arg0: i32, %arg1: i32, %arg2: i32) -> (i32, i32) {
    %c0_i32 = arith.constant 0 : i32
    return %arg0, %arg2 : i32, i32
  }
  func.func @transform_1(%arg0: i32, %arg1: i32, %arg2: i32) -> (i32, i32) {
    %c0_i32 = arith.constant 0 : i32
    return %arg2, %arg1 : i32, i32
  }
  func.func @transform_2(%arg0: i32, %arg1: i32, %arg2: i32) -> (i32, i32) {
    %c0_i32 = arith.constant 0 : i32
    %c0_i32_0 = arith.constant 0 : i32
    return %c0_i32, %arg1 : i32, i32
  }
  func.func @transform_3(%arg0: i32, %arg1: i32, %arg2: i32) -> (i32, i32) {
    %c0_i32 = arith.constant 0 : i32
    %c0_i32_0 = arith.constant 0 : i32
    return %c0_i32, %arg1 : i32, i32
  }
  func.func @transform_4(%arg0: i32, %arg1: i32, %arg2: i32) -> (i32, i32) {
    %c0_i32 = arith.constant 0 : i32
    return %arg0, %arg1 : i32, i32
  }
}

</mosaic_0001>

<llo_original>
// kernel: ulinear_forward.1
$region0: #{ulinear_forward.1}
  #allocation0 [shape = 'u32[]', space=smem, size = 0x4, offset = 0x4, fixed_abs, tag = 'smem constant byte address 0x4 - core index']
  #allocation1 [shape = 'u32[72,128]{1,0:T(1,128)}', space=vmem, size = 0x9000, scoped, tag = 'internal scratch']
  %s0 = inlined_call_operand.vmem [shape: bf16[16,128], index: 0, kind: input, shape index: {}]
  %s1 = inlined_call_operand.vmem [shape: bf16[128,128], index: 1, kind: input, shape index: {}]
  %s2 = inlined_call_operand.vmem [shape: f32[1,128], index: 2, kind: input, shape index: {}]
  %s3 = inlined_call_operand.vmem [shape: f32[1,128], index: 3, kind: input, shape index: {}]
  %s4 = inlined_call_operand.vmem [shape: f32[16,128], index: 4, kind: output, shape index: {}]
  %s5 = sld [smem:[#allocation0]]
  $region34: #{ulinear_forward.1} parent=0
    _
  %s7 = ssub.s32 1, %s5
  %s8 = scalar_select 0, %s7, %s5
  // Predicated region
  $region2: #{ulinear_forward.1} parent=0 // pred_check
    _
  $region3: #{ulinear_forward.1} parent=0 // pred_check_branch
    %10 = sbr.rel (0) target = $region5
  $region4: #{ulinear_forward.1} parent=0 // pred_region
    _
  $region5: #{ulinear_forward.1} parent=0 // pred_fallthru
    _
  // Predicated region
  $region6: #{ulinear_forward.1} parent=0 // pred_check
    _
  $region7: #{ulinear_forward.1} parent=0 // pred_check_branch
    %12 = sbr.rel (0) target = $region9
  $region8: #{ulinear_forward.1} parent=0 // pred_region
    _
  $region9: #{ulinear_forward.1} parent=0 // pred_fallthru
    _
  // Predicated region
  $region10: #{ulinear_forward.1} parent=0 // pred_check
    _
  $region11: #{ulinear_forward.1} parent=0 // pred_check_branch
    %14 = sbr.rel (0) target = $region13
  $region12: #{ulinear_forward.1} parent=0 // pred_region
    _
  $region13: #{ulinear_forward.1} parent=0 // pred_fallthru
    _
  // Predicated region
  $region14: #{ulinear_forward.1} parent=0 // pred_check
    _
  $region15: #{ulinear_forward.1} parent=0 // pred_check_branch
    %16 = sbr.rel (0) target = $region17
  $region16: #{ulinear_forward.1} parent=0 // pred_region
    _
  $region17: #{ulinear_forward.1} parent=0 // pred_fallthru
    _
  %p17 = scmp.eq.s32.totalorder 0, 0
  // Predicated region
  $region18: #{ulinear_forward.1} parent=0 // pred_check
    %p18 = pneg %p17
  $region19: #{ulinear_forward.1} parent=0 // pred_check_branch
    %20 = sbr.rel (%p18) target = $region21
  $region20: #{ulinear_forward.1} parent=0 // pred_region
    %21 = vst [vmem:[%s4] sm:$0xff] 0.0
    %22 = vst [vmem:[%s4 + $0x8] sm:$0xff] 0.0
  $region21: #{ulinear_forward.1} parent=0 // pred_fallthru
    _
  %v23 = vld [vmem:[%s4] sm:$0xff]
  %v24 = vld [vmem:[%s4 + $0x8] sm:$0xff]
  %v25 = vld [vmem:[%s0] sm:$0xf]
  %v26 = vld [vmem:[%s0 + $0x4] sm:$0xf]
  %v27 = vld [vmem:[%s1] sm:$0xf]
  %v28 = vld [vmem:[%s1 + $0x4] sm:$0xf]
  %v29 = vld [vmem:[%s1 + $0x8] sm:$0xf]
  %v30 = vld [vmem:[%s1 + $0xc] sm:$0xf]
  %v31 = vld [vmem:[%s1 + $0x10] sm:$0xf]
  %v32 = vld [vmem:[%s1 + $0x14] sm:$0xf]
  %v33 = vld [vmem:[%s1 + $0x18] sm:$0xf]
  %v34 = vld [vmem:[%s1 + $0x1c] sm:$0xf]
  %v35 = vld [vmem:[%s1 + $0x20] sm:$0xf]
  %v36 = vld [vmem:[%s1 + $0x24] sm:$0xf]
  %v37 = vld [vmem:[%s1 + $0x28] sm:$0xf]
  %v38 = vld [vmem:[%s1 + $0x2c] sm:$0xf]
  %v39 = vld [vmem:[%s1 + $0x30] sm:$0xf]
  %v40 = vld [vmem:[%s1 + $0x34] sm:$0xf]
  %v41 = vld [vmem:[%s1 + $0x38] sm:$0xf]
  %v42 = vld [vmem:[%s1 + $0x3c] sm:$0xf]
  %v45 = vunpack.c.l.b16 %v25
  %v46 = vunpack.c.l.b16 %v26
  %v47 = vpack.c.b16 %v46, %v45
  %v65 = vunpack.c.l.b16 %v27
  %v66 = vunpack.c.l.b16 %v28
  %v67 = vunpack.c.l.b16 %v29
  %v68 = vunpack.c.l.b16 %v30
  %v69 = vunpack.c.l.b16 %v31
  %v70 = vunpack.c.l.b16 %v32
  %v71 = vunpack.c.l.b16 %v33
  %v72 = vunpack.c.l.b16 %v34
  %v73 = vunpack.c.l.b16 %v35
  %v74 = vunpack.c.l.b16 %v36
  %v75 = vunpack.c.l.b16 %v37
  %v76 = vunpack.c.l.b16 %v38
  %v77 = vunpack.c.l.b16 %v39
  %v78 = vunpack.c.l.b16 %v40
  %v79 = vunpack.c.l.b16 %v41
  %v80 = vunpack.c.l.b16 %v42
  %v81 = vpack.c.b16 %v66, %v65
  %v82 = vpack.c.b16 %v68, %v67
  %v83 = vpack.c.b16 %v70, %v69
  %v84 = vpack.c.b16 %v72, %v71
  %v85 = vpack.c.b16 %v74, %v73
  %v86 = vpack.c.b16 %v76, %v75
  %v87 = vpack.c.b16 %v78, %v77
  %v88 = vpack.c.b16 %v80, %v79
  %97 = vmatpush.bf16.msra.mxu0 %v88
  %98 = vmatpush.bf16.msra.mxu0 %v87
  %99 = vmatpush.bf16.msra.mxu0 %v86
  %100 = vmatpush.bf16.msra.mxu0 %v85
  %101 = vmatpush.bf16.msra.mxu0 %v84
  %102 = vmatpush.bf16.msra.mxu0 %v83
  %103 = vmatpush.bf16.msra.mxu0 %v82
  %104 = vmatpush.bf16.msra.mxu0 %v81
  %105 = vmatmul.bf16.gmra.mxu0 %v47
  %v106 = vpop.f32.mrf.mxu0
  %v107 = vadd.f32 0.0, %v106
  %v108 = vpop.f32.mrf.mxu0
  %v109 = vadd.f32 0.0, %v108
  %110 = vdwg.mxu0
  %v111 = vadd.f32 %v23, %v107
  %v112 = vadd.f32 %v24, %v109
  %113 = vst [vmem:[%s4] sm:$0xff] %v111
  %114 = vst [vmem:[%s4 + $0x8] sm:$0xff] %v112
  // Predicated region
  $region22: #{ulinear_forward.1} parent=0 // pred_check
    %p115 = pneg %p17
  $region23: #{ulinear_forward.1} parent=0 // pred_check_branch
    %117 = sbr.rel (%p115) target = $region25
  $region24: #{ulinear_forward.1} parent=0 // pred_region
    %v118 = vld [vmem:[%s4] sm:$0xff]
    %v119 = vld [vmem:[%s4 + $0x8] sm:$0xff]
    %v120 = vld [vmem:[%s2] sm:$0x1]
    %v122 = vperm.slane %v120, 0
    %v124 = vmul.f32 %v118, %v122
    %v125 = vmul.f32 %v119, %v122
    %v126 = vld [vmem:[%s3] sm:$0x1]
    %v128 = vperm.slane %v126, 0
    %v130 = vadd.f32 %v124, %v128
    %v131 = vadd.f32 %v125, %v128
    %132 = vst [vmem:[%s4] sm:$0xff] %v130
    %133 = vst [vmem:[%s4 + $0x8] sm:$0xff] %v131
  $region25: #{ulinear_forward.1} parent=0 // pred_fallthru
    _
  // Predicated region
  $region26: #{ulinear_forward.1} parent=0 // pred_check
    _
  $region27: #{ulinear_forward.1} parent=0 // pred_check_branch
    %135 = sbr.rel (0) target = $region29
  $region28: #{ulinear_forward.1} parent=0 // pred_region
    _
  $region29: #{ulinear_forward.1} parent=0 // pred_fallthru
    _
  // Predicated region
  $region30: #{ulinear_forward.1} parent=0 // pred_check
    _
  $region31: #{ulinear_forward.1} parent=0 // pred_check_branch
    %137 = sbr.rel (0) target = $region33
  $region32: #{ulinear_forward.1} parent=0 // pred_region
    _
  $region33: #{ulinear_forward.1} parent=0 // pred_fallthru
    _

</llo_original>
